<compile_context>
chip_gen: v7x
topology: tpu7x:2x2x1
jax: 0.10.0
libtpu: 0.0.40
codegen_flags: <defaults>
</compile_context>

<pallas_src>
import jax
import jax.numpy as jnp
from jax import lax
from jax.experimental import pallas as pl
from jax.experimental.pallas import tpu as pltpu


def _onehot_dict_kernel(x_ref, dict_ref, out_ref):
    # x_ref:    (tm, V)  logits tile (native dtype; no f32 upcast)
    # dict_ref: (V, E)   full embedding table, resident in VMEM (constant block)
    # out_ref:  (tm, E)  gathered embeddings
    x = x_ref[...]
    tm, V = x.shape

    col = lax.broadcasted_iota(jnp.int32, (tm, V), 1)

    # torch.argmax semantics: first occurrence wins; NaN beats every finite
    # value (and an earlier NaN beats a later +inf).
    maxv = jnp.max(x, axis=-1, keepdims=True)
    finite_idx = jnp.min(jnp.where(x == maxv, col, V), axis=-1, keepdims=True)
    nan_idx = jnp.min(jnp.where(x != x, col, V), axis=-1, keepdims=True)
    idx = jnp.where(nan_idx < V, nan_idx, finite_idx)            # (tm, 1), always in [0, V)

    # One-hot gather on the MXU. Exact: one-hot is 0/1 in the dictionary dtype
    # and accumulation is f32, so each output element is a single dict value.
    # Do NOT down-cast the dot inputs.
    onehot = (col == idx).astype(dict_ref.dtype)                 # (tm, V)
    out = jnp.dot(onehot, dict_ref[...], preferred_element_type=jnp.float32)
    out_ref[...] = out.astype(out_ref.dtype)


def _round_up(a, b):
    return ((a + b - 1) // b) * b


def one_hot_dictionary(x, dictionary, *, tm=None, vmem_budget_bytes=48 * 1024 * 1024):
    """x: (B, N, vocab_size); dictionary: (vocab_size, emb_size) -> (B, N, emb_size)."""
    B, N, V = x.shape
    Vd, E = dictionary.shape
    assert V == Vd, "vocab_size mismatch between logits and dictionary"
    M = B * N

    x_bytes = jnp.dtype(x.dtype).itemsize
    d_bytes = jnp.dtype(dictionary.dtype).itemsize
    o_bytes = d_bytes

    # Sublane alignment: 8 rows per f32 vreg, 16 for 2-byte dtypes.
    align = 16 if min(x_bytes, o_bytes) == 2 else 8

    if tm is None:
        # Per-step VMEM: double-buffered x tile + double-buffered out tile
        # + double-buffered (constant-index) dictionary block.
        dict_vmem = 2 * V * E * d_bytes
        per_row = 2 * V * x_bytes + 2 * E * o_bytes
        avail = max(vmem_budget_bytes - dict_vmem, 0)
        tm = avail // max(per_row, 1)
        tm = min(tm, 1024)                       # diminishing returns past ~512 rows
        tm = min(tm, _round_up(M, align))        # don't tile wider than the problem
        tm = max(align, (tm // align) * align)   # sublane alignment
    assert tm % 8 == 0

    # Ragged last tile: pad rows to a tile multiple; padded rows argmax to
    # index 0 and their embeddings are sliced off below.
    Mp = _round_up(M, tm)
    x2 = x.reshape(M, V)
    if Mp != M:
        x2 = jnp.pad(x2, ((0, Mp - M), (0, 0)))

    # Explicit scoped-VMEM limit: computed need + headroom, clamped under the
    # v7x 64 MiB physical ceiling (v5e/v6e have 128 MiB physical).
    est_vmem = 2 * tm * V * x_bytes + 2 * tm * E * o_bytes + 2 * V * E * d_bytes
    vmem_limit = int(min(max(est_vmem + (4 << 20), 32 << 20), 60 << 20))

    cost = pl.CostEstimate(
        flops=2 * Mp * V * E,
        transcendentals=0,
        bytes_accessed=Mp * V * x_bytes + V * E * d_bytes + Mp * E * o_bytes,
    )

    out = pl.pallas_call(
        _onehot_dict_kernel,
        out_shape=jax.ShapeDtypeStruct((Mp, E), dictionary.dtype),
        grid_spec=pltpu.PrefetchScalarGridSpec(
            num_scalar_prefetch=0,
            grid=(Mp // tm,),
            in_specs=[
                pl.BlockSpec((tm, V), lambda i: (i, 0)),   # logits tile (streamed)
                pl.BlockSpec((V, E), lambda i: (0, 0)),    # full dictionary (constant block, stays resident)
            ],
            out_specs=pl.BlockSpec((tm, E), lambda i: (i, 0)),
        ),
        compiler_params=pltpu.CompilerParams(
            dimension_semantics=("parallel",),   # shard M across TCs (v7x megacore)
            vmem_limit_bytes=vmem_limit,
        ),
        cost_estimate=cost,
    )(x2, dictionary)

    if Mp != M:
        out = out[:M]
    return out.reshape(B, N, E)


def _reference(x, dictionary):
    return jnp.take(dictionary, jnp.argmax(x, axis=-1), axis=0)


if __name__ == "__main__":
    # Small shapes consistent with the module's forward: x is (B, N, vocab_size).
    B, N, vocab_size, emb_size = 2, 8, 32, 64

    key = jax.random.PRNGKey(0)
    kx, kd, kx2, kx3 = jax.random.split(key, 4)
    x = jax.random.normal(kx, (B, N, vocab_size), dtype=jnp.float32)
    # nn.Embedding default init: N(0, 1)
    dictionary = jax.random.normal(kd, (vocab_size, emb_size), dtype=jnp.float32)

    # 1) Base case (f32 logits, M a multiple of the tile).
    out = jax.block_until_ready(one_hot_dictionary(x, dictionary))
    assert out.shape == (B, N, emb_size)
    assert jnp.array_equal(out, _reference(x, dictionary)), "mismatch vs reference (f32)"

    # 2) Ragged M (exercises the wrapper-side padding path).
    x_r = jax.random.normal(kx2, (B, 7, vocab_size), dtype=jnp.float32)
    out_r = jax.block_until_ready(one_hot_dictionary(x_r, dictionary))
    assert out_r.shape == (B, 7, emb_size)
    assert jnp.array_equal(out_r, _reference(x_r, dictionary)), "mismatch vs reference (ragged)"

    # 3) bf16 logits (exercises the no-upcast argmax path; gather stays exact).
    x_bf = jax.random.normal(kx3, (B, N, vocab_size), dtype=jnp.bfloat16)
    out_bf = jax.block_until_ready(one_hot_dictionary(x_bf, dictionary))
    assert jnp.array_equal(out_bf, _reference(x_bf, dictionary)), "mismatch vs reference (bf16)"

    print("KERNEL_OK")
</pallas_src>

<mosaic_0001>
module attributes {stable_mosaic.version = 11 : i64} {
  func.func @_onehot_dict_kernel(%arg0: i32, %arg1: memref<16x32xf32, #tpu.memory_space<vmem>>, %arg2: memref<32x64xf32, #tpu.memory_space<vmem>>, %arg3: memref<16x64xf32, #tpu.memory_space<vmem>>) attributes {dimension_semantics = [#tpu.dimension_semantics<parallel>], iteration_bounds = array<i64: 1>, scalar_prefetch = 0 : i64, scratch_operands = 0 : i64, tpu.core_type = #tpu.core_type<tc>, window_params = [{transform_indices = @transform_0, window_bounds = array<i64: 16, 32>}, {pipeline_mode = #tpu.pipeline_mode<synchronous>, transform_indices = @transform_1, window_bounds = array<i64: 32, 64>}, {transform_indices = @transform_2, window_bounds = array<i64: 16, 64>}]} {
    %c0 = arith.constant 0 : index
    %c0_0 = arith.constant 0 : index
    %0 = vector.load %arg1[%c0, %c0_0] : memref<16x32xf32, #tpu.memory_space<vmem>>, vector<16x32xf32>
    %1 = tpu.iota {dimensions = array<i32: 1>} : vector<16x32xi32>
    %cst = arith.constant dense<0xFF800000> : vector<16xf32>
    %2 = vector.multi_reduction <maximumf>, %0, %cst [1] : vector<16x32xf32> to vector<16xf32>
    %3 = vector.shape_cast %2 : vector<16xf32> to vector<16x1xf32>
    %4 = vector.broadcast %3 : vector<16x1xf32> to vector<16x32xf32>
    %5 = arith.cmpf oeq, %0, %4 : vector<16x32xf32>
    %c32_i32 = arith.constant 32 : i32
    %6 = vector.broadcast %c32_i32 : i32 to vector<16x32xi32>
    %7 = arith.select %5, %1, %6 : vector<16x32xi1>, vector<16x32xi32>
    %cst_1 = arith.constant dense<2147483647> : vector<16xi32>
    %8 = vector.multi_reduction <minsi>, %7, %cst_1 [1] : vector<16x32xi32> to vector<16xi32>
    %9 = vector.shape_cast %8 : vector<16xi32> to vector<16x1xi32>
    %10 = arith.cmpf one, %0, %0 : vector<16x32xf32>
    %c32_i32_2 = arith.constant 32 : i32
    %11 = vector.broadcast %c32_i32_2 : i32 to vector<16x32xi32>
    %12 = arith.select %10, %1, %11 : vector<16x32xi1>, vector<16x32xi32>
    %cst_3 = arith.constant dense<2147483647> : vector<16xi32>
    %13 = vector.multi_reduction <minsi>, %12, %cst_3 [1] : vector<16x32xi32> to vector<16xi32>
    %14 = vector.shape_cast %13 : vector<16xi32> to vector<16x1xi32>
    %c32_i32_4 = arith.constant 32 : i32
    %15 = vector.broadcast %c32_i32_4 : i32 to vector<16x1xi32>
    %16 = arith.cmpi slt, %14, %15 : vector<16x1xi32>
    %17 = arith.select %16, %14, %9 : vector<16x1xi1>, vector<16x1xi32>
    %18 = vector.broadcast %17 : vector<16x1xi32> to vector<16x32xi32>
    %19 = arith.cmpi eq, %1, %18 : vector<16x32xi32>
    %20 = arith.extui %19 : vector<16x32xi1> to vector<16x32xi32>
    %21 = arith.sitofp %20 : vector<16x32xi32> to vector<16x32xf32>
    %c0_5 = arith.constant 0 : index
    %c0_6 = arith.constant 0 : index
    %22 = vector.load %arg2[%c0_5, %c0_6] : memref<32x64xf32, #tpu.memory_space<vmem>>, vector<32x64xf32>
    %cst_7 = arith.constant dense<0.000000e+00> : vector<16x64xf32>
    %23 = tpu.matmul %21, %22, %cst_7 {dimension_numbers = #tpu.dot_dimension_numbers<[1], [0], [0], [1], [0, 0, 1, 1], [], []>} : vector<16x32xf32>, vector<32x64xf32>, vector<16x64xf32> -> vector<16x64xf32>
    %c0_8 = arith.constant 0 : index
    %c0_9 = arith.constant 0 : index
    %24 = vector.load %arg3[%c0_8, %c0_9] : memref<16x64xf32, #tpu.memory_space<vmem>>, vector<16x64xf32>
    tpu.vector_store %arg3[%c0_8, %c0_9], %23 {strides = array<i32>} : memref<16x64xf32, #tpu.memory_space<vmem>>, vector<16x64xf32>,
    return
  }
  func.func @transform_0(%arg0: i32) -> (i32, i32) {
    %c0_i32 = arith.constant 0 : i32
    %c0_i32_0 = arith.constant 0 : i32
    return %arg0, %c0_i32 : i32, i32
  }
  func.func @transform_1(%arg0: i32) -> (i32, i32) {
    %c0_i32 = arith.constant 0 : i32
    %c0_i32_0 = arith.constant 0 : i32
    %c0_i32_1 = arith.constant 0 : i32
    return %c0_i32, %c0_i32_0 : i32, i32
  }
  func.func @transform_2(%arg0: i32) -> (i32, i32) {
    %c0_i32 = arith.constant 0 : i32
    %c0_i32_0 = arith.constant 0 : i32
    return %arg0, %c0_i32 : i32, i32
  }
}

</mosaic_0001>

<llo_original>
// kernel: tpu_custom_call.1
$region0: #{tpu_custom_call.1}
  #allocation0 [shape = 'u32[]', space=smem, size = 0x4, offset = 0x4, fixed_abs, tag = 'smem constant byte address 0x4 - core index']
  #allocation1 [shape = 'u32[144,128]{1,0:T(1,128)}', space=vmem, size = 0x12000, scoped, tag = 'internal scratch']
  %s0 = inlined_call_operand.hbm [shape: f32[16,32], index: 0, kind: input, shape index: {}]
  %s1 = inlined_call_operand.hbm [shape: f32[32,64], index: 1, kind: input, shape index: {}]
  %s2 = inlined_call_operand.hbm [shape: f32[16,64], index: 2, kind: output, shape index: {}]
  %s3 = sld [smem:[#allocation0]]
  $region26: #{tpu_custom_call.1} parent=0
    _
  %s5 = ssub.s32 1, %s3
  %s6 = scalar_select 0, %s5, %s3
  $region1: #{tpu_custom_call.1} parent=0
    #allocation2 [shape = 'u8[8192]{0}', space=vmem, size = 0x2000, scoped, tag = 'input window, operand 0, single buffered']
    #allocation3 [shape = 's32[1]{0}', space=sflag, size = 0x4, scoped, tag = 'scoped memory for tpu_custom_call.1']
    #allocation4 [shape = 's32[1]{0}', space=sflag, size = 0x4, scoped, tag = 'scoped memory for tpu_custom_call.1']
    #allocation5 [shape = 'u8[16384]{0}', space=vmem, size = 0x4000, scoped, tag = 'input window, operand 1, single buffered']
    #allocation6 [shape = 's32[1]{0}', space=sflag, size = 0x4, scoped, tag = 'scoped memory for tpu_custom_call.1']
    #allocation7 [shape = 'u8[8192]{0}', space=vmem, size = 0x2000, scoped, tag = 'output window, operand 0, single buffered']
    %7 = vsyncpa [#allocation3], 0
    %8 = vsyncpa [#allocation6], 0
    %9 = vsyncpa [#allocation4], 0
    // Predicated region
    $region2: #{tpu_custom_call.1} parent=1 // pred_check
      _
    $region3: #{tpu_custom_call.1} parent=1 // pred_check_branch
      %11 = sbr.rel (0) target = $region5
    $region4: #{tpu_custom_call.1} parent=1 // pred_region
      %s13 = ssub.s32 256, 256
      %14 = vsyncadd [#allocation3], %s13
      %s15 = sshll.u32 [#allocation2], 4
      %s16 = int_to_ptr.vmem [resolvable:$true] %s15
      %21 = dma.hbm_to_vmem [thread:$0]  %s0, 256, %s16, [#allocation3], 128, 128, 8
    $region5: #{tpu_custom_call.1} parent=1 // pred_fallthru
      _
    // Predicated region
    $region6: #{tpu_custom_call.1} parent=1 // pred_check
      _
    $region7: #{tpu_custom_call.1} parent=1 // pred_check_branch
      %23 = sbr.rel (0) target = $region9
    $region8: #{tpu_custom_call.1} parent=1 // pred_region
      %s25 = ssub.s32 512, 512
      %26 = vsyncadd [#allocation6], %s25
      %s27 = sshll.u32 [#allocation5], 4
      %s28 = int_to_ptr.vmem [resolvable:$true] %s27
      %33 = dma.hbm_to_vmem [thread:$0]  %s1, 512, %s28, [#allocation6], 128, 128, 8
    $region9: #{tpu_custom_call.1} parent=1 // pred_fallthru
      _
    // Predicated region
    $region10: #{tpu_custom_call.1} parent=1 // pred_check
      _
    $region11: #{tpu_custom_call.1} parent=1 // pred_check_branch
      %35 = sbr.rel (0) target = $region13
    $region12: #{tpu_custom_call.1} parent=1 // pred_region
      %36 = dma.done [#allocation3], 256
    $region13: #{tpu_custom_call.1} parent=1 // pred_fallthru
      _
    // Predicated region
    $region14: #{tpu_custom_call.1} parent=1 // pred_check
      _
    $region15: #{tpu_custom_call.1} parent=1 // pred_check_branch
      %38 = sbr.rel (0) target = $region17
    $region16: #{tpu_custom_call.1} parent=1 // pred_region
      %39 = dma.done [#allocation6], 512
    $region17: #{tpu_custom_call.1} parent=1 // pred_fallthru
      _
    %v40 = vld [vmem:[#allocation2] sm:$0xff]
    %v41 = vld [vmem:[#allocation2 + $0x8] sm:$0xff]
    %v42 = vlaneseq
    %v43 = vand.u32 %v42, 127
    %vm44 = vcmask 261120
    %v45 = vsel %vm44, %v40, -inf
    %46 = vmax.xlane.f32.xlu0 %v45
    %v47 = vpop.xlane.xlu0 %46
    %v48 = vsel %vm44, %v41, -inf
    %49 = vmax.xlane.f32.xlu0 %v48
    %v50 = vpop.xlane.xlu0 %49
    %vm51 = vcmp.eq.f32.partialorder %v40, %v47
    %vm52 = vcmp.eq.f32.partialorder %v41, %v50
    %v53 = vsel %vm51, %v43, 32
    %v54 = vsel %vm52, %v43, 32
    %v55 = vsel %vm44, %v53, 2147483647
    %v56 = vand.u32 %v55, 65535
    %v57 = vshra.s32 %v55, 16
    %v58 = vcvt.s32.f32 %v56
    %v59 = vcvt.s32.f32 %v57
    %60 = vmin.xlane.f32.xlu0 %v59
    %v61 = vpop.xlane.xlu0 %60
    %vm62 = vcmp.eq.f32.partialorder %v59, %v61
    %v63 = vsel %vm62, %v58, inf
    %64 = vmin.xlane.f32.xlu0 %v63
    %v65 = vpop.xlane.xlu0 %64
    %v66 = vcvt.f32.s32 %v65
    %v67 = vcvt.f32.s32 %v61
    %v68 = vshll.u32 %v67, 16
    %v69 = vadd.s32 %v68, %v66
    %v70 = vsel %vm44, %v54, 2147483647
    %v71 = vand.u32 %v70, 65535
    %v72 = vshra.s32 %v70, 16
    %v73 = vcvt.s32.f32 %v71
    %v74 = vcvt.s32.f32 %v72
    %75 = vmin.xlane.f32.xlu0 %v74
    %v76 = vpop.xlane.xlu0 %75
    %vm77 = vcmp.eq.f32.partialorder %v74, %v76
    %v78 = vsel %vm77, %v73, inf
    %79 = vmin.xlane.f32.xlu0 %v78
    %v80 = vpop.xlane.xlu0 %79
    %v81 = vcvt.f32.s32 %v80
    %v82 = vcvt.f32.s32 %v76
    %v83 = vshll.u32 %v82, 16
    %v84 = vadd.s32 %v83, %v81
    %vm85 = vcmp.ne.f32.partialorder %v40, %v40
    %vm86 = vcmp.ne.f32.partialorder %v41, %v41
    %v87 = vsel %vm85, %v43, 32
    %v88 = vsel %vm86, %v43, 32
    %v89 = vsel %vm44, %v87, 2147483647
    %v90 = vand.u32 %v89, 65535
    %v91 = vshra.s32 %v89, 16
    %v92 = vcvt.s32.f32 %v90
    %v93 = vcvt.s32.f32 %v91
    %94 = vmin.xlane.f32.xlu0 %v93
    %v95 = vpop.xlane.xlu0 %94
    %vm96 = vcmp.eq.f32.partialorder %v93, %v95
    %v97 = vsel %vm96, %v92, inf
    %98 = vmin.xlane.f32.xlu0 %v97
    %v99 = vpop.xlane.xlu0 %98
    %v100 = vcvt.f32.s32 %v99
    %v101 = vcvt.f32.s32 %v95
    %v102 = vshll.u32 %v101, 16
    %v103 = vadd.s32 %v102, %v100
    %v104 = vsel %vm44, %v88, 2147483647
    %v105 = vand.u32 %v104, 65535
    %v106 = vshra.s32 %v104, 16
    %v107 = vcvt.s32.f32 %v105
    %v108 = vcvt.s32.f32 %v106
    %109 = vmin.xlane.f32.xlu0 %v108
    %v110 = vpop.xlane.xlu0 %109
    %vm111 = vcmp.eq.f32.partialorder %v108, %v110
    %v112 = vsel %vm111, %v107, inf
    %113 = vmin.xlane.f32.xlu0 %v112
    %v114 = vpop.xlane.xlu0 %113
    %v115 = vcvt.f32.s32 %v114
    %v116 = vcvt.f32.s32 %v110
    %v117 = vshll.u32 %v116, 16
    %v118 = vadd.s32 %v117, %v115
    %vm119 = vcmp.lt.s32.totalorder %v103, 32
    %vm120 = vcmp.lt.s32.totalorder %v118, 32
    %v121 = vsel %vm119, %v103, %v69
    %v122 = vsel %vm120, %v118, %v84
    %vm123 = vcmp.eq.s32.totalorder %v43, %v121
    %vm124 = vcmp.eq.s32.totalorder %v43, %v122
    %v125 = vsel %vm123, 1, 0
    %v126 = vsel %vm124, 1, 0
    %v127 = vcvt.s32.f32 %v125
    %v128 = vcvt.s32.f32 %v126
    %v129 = vld [vmem:[#allocation5] sm:$0xff]
    %v130 = vld [vmem:[#allocation5 + $0x8] sm:$0xff]
    %v131 = vld [vmem:[#allocation5 + $0x10] sm:$0xff]
    %v132 = vld [vmem:[#allocation5 + $0x18] sm:$0xff]
    %v134 = vsel %vm44, %v127, 0
    %v137 = vsel %vm44, %v128, 0
    %139 = vmatprep.subr.mxu0 0.0
    %140 = vmatpush1.msra.mxu0 %v129
    %141 = vmatprep.subr.mxu0 0.0
    %142 = vmatpush1.msra.mxu0 %v130
    %143 = vmatprep.subr.mxu0 0.0
    %144 = vmatpush1.msra.mxu0 %v131
    %145 = vmatprep.subr.mxu0 0.0
    %146 = vmatpush1.msra.mxu0 %v132
    %147 = vmatprep.subr.mxu0 0.0
    %148 = vmatpush1.msra.mxu0 0.0
    %149 = vmatprep.subr.mxu0 0.0
    %150 = vmatpush1.msra.mxu0 0.0
    %151 = vmatprep.subr.mxu0 0.0
    %152 = vmatpush1.msra.mxu0 0.0
    %153 = vmatprep.subr.mxu0 0.0
    %154 = vmatpush1.msra.mxu0 0.0
    %155 = vmatprep.subr.mxu0 0.0
    %156 = vmatpush1.msra.mxu0 0.0
    %157 = vmatprep.subr.mxu0 0.0
    %158 = vmatpush1.msra.mxu0 0.0
    %159 = vmatprep.subr.mxu0 0.0
    %160 = vmatpush1.msra.mxu0 0.0
    %161 = vmatprep.subr.mxu0 0.0
    %162 = vmatpush1.msra.mxu0 0.0
    %163 = vmatprep.subr.mxu0 0.0
    %164 = vmatpush1.msra.mxu0 0.0
    %165 = vmatprep.subr.mxu0 0.0
    %166 = vmatpush1.msra.mxu0 0.0
    %167 = vmatprep.subr.mxu0 0.0
    %168 = vmatpush1.msra.mxu0 0.0
    %169 = vmatprep.subr.mxu0 0.0
    %170 = vmatpush1.msra.mxu0 0.0
    %171 = vmatprep.subr.mxu0 0.0
    %172 = vmatpush1.msra.mxu0 0.0
    %173 = vmatprep.subr.mxu0 0.0
    %174 = vmatpush1.msra.mxu0 0.0
    %175 = vmatprep.subr.mxu0 0.0
    %176 = vmatpush1.msra.mxu0 0.0
    %177 = vmatprep.subr.mxu0 0.0
    %178 = vmatpush1.msra.mxu0 0.0
    %179 = vmatprep.subr.mxu0 0.0
    %180 = vmatpush1.msra.mxu0 0.0
    %181 = vmatprep.subr.mxu0 0.0
    %182 = vmatpush1.msra.mxu0 0.0
    %183 = vmatprep.subr.mxu0 0.0
    %184 = vmatpush1.msra.mxu0 0.0
    %185 = vmatprep.subr.mxu0 0.0
    %186 = vmatpush1.msra.mxu0 0.0
    %187 = vmatprep.subr.mxu0 0.0
    %188 = vmatpush1.msra.mxu0 0.0
    %189 = vmatprep.subr.mxu0 0.0
    %190 = vmatpush1.msra.mxu0 0.0
    %191 = vmatprep.subr.mxu0 0.0
    %192 = vmatpush1.msra.mxu0 0.0
    %193 = vmatprep.subr.mxu0 0.0
    %194 = vmatpush1.msra.mxu0 0.0
    %195 = vmatprep.subr.mxu0 0.0
    %196 = vmatpush1.msra.mxu0 0.0
    %197 = vmatprep.subr.mxu0 0.0
    %198 = vmatpush1.msra.mxu0 0.0
    %199 = vmatprep.subr.mxu0 0.0
    %200 = vmatpush1.msra.mxu0 0.0
    %201 = vmatprep.subr.mxu0 0.0
    %202 = vmatpush1.msra.mxu0 0.0
    %203 = vmatprep.mubr.f32.mxu0 0.0
    %204 = vmatmul.mubr.f32.gmra.mrb[0].mxu0 %v134
    %v205 = vpop.f32.mrb[0].mxu0
    %v206 = vadd.f32 0.0, %v205
    %v207 = vpop.f32.mrb[0].mxu0
    %208 = vmatprep.mubr.f32.mxu0 0.0
    %209 = vmatmul.mubr.f32.gmra.mrb[0].mxu0 %v137
    %v210 = vpop.f32.mrb[0].mxu0
    %v211 = vadd.f32 0.0, %v210
    %v212 = vpop.f32.mrb[0].mxu0
    %213 = vdwg.mxu0
    %vm214 = vcmask 523264
    %215 = vst.msk [vmem:[#allocation7] sm:$0xff] %vm214, %v206
    %216 = vst.msk [vmem:[#allocation7 + $0x8] sm:$0xff] %vm214, %v211
    // Predicated region
    $region18: #{tpu_custom_call.1} parent=1 // pred_check
      _
    $region19: #{tpu_custom_call.1} parent=1 // pred_check_branch
      %218 = sbr.rel (0) target = $region21
    $region20: #{tpu_custom_call.1} parent=1 // pred_region
      %s220 = ssub.s32 256, 256
      %221 = vsyncadd [#allocation4], %s220
      %s222 = sshll.u32 [#allocation7], 4
      %s223 = int_to_ptr.vmem [resolvable:$true] %s222
      %228 = dma.vmem_to_hbm [thread:$0]  %s223, 256, %s2, [#allocation4], 128, 128, 8
    $region21: #{tpu_custom_call.1} parent=1 // pred_fallthru
      _
    // Predicated region
    $region22: #{tpu_custom_call.1} parent=1 // pred_check
      _
    $region23: #{tpu_custom_call.1} parent=1 // pred_check_branch
      %230 = sbr.rel (0) target = $region25
    $region24: #{tpu_custom_call.1} parent=1 // pred_region
      %231 = dma.done [#allocation4], 256
    $region25: #{tpu_custom_call.1} parent=1 // pred_fallthru
      _
    %232 = vsyncpa [#allocation3], 1
    %233 = vsyncpa [#allocation6], 1
    %234 = vsyncpa [#allocation4], 1

</llo_original>
